<compile_context>
chip_gen: v7x
topology: tpu7x:2x2x1
jax: 0.10.0
libtpu: 0.0.40
codegen_flags: <defaults>
</compile_context>

<pallas_src>
import jax
import jax.numpy as jnp
import numpy as np
from jax.experimental import pallas as pl
from jax.experimental.pallas import tpu as pltpu

X_DIM = 64          # flattened input dim
C_DIM = 8           # latent dim (z_dim)
M_DIMS = (32, 64)   # decoder hidden dims; encoder uses reversed order
LOG_VAR_X = 0.0     # BaseVAE log_var_x default

LANES = 128

# ---- packed INPUT slab layout (lane-dense, 128 lanes) ----
IN_X_OFF = 0                       # lanes [0, 64)   : x
IN_EPS_OFF = X_DIM                 # lanes [64, 72)  : eps
IN_PAD_OFF = IN_EPS_OFF + C_DIM    # lanes [72, 128) : zero padding

# ---- packed OUTPUT slab layout (lane-dense, 128 lanes) ----
MU_X_OFF = 0                       # lanes [0, 64)
MU_C_OFF = X_DIM                   # lanes [64, 72)
LV_C_OFF = MU_C_OFF + C_DIM        # lanes [72, 80)
C_OFF = LV_C_OFF + C_DIM           # lanes [80, 88)
OUT_PAD = LANES - (C_OFF + C_DIM)  # lanes [88, 128) zero padding

TB_MAX = 2048                      # max batch tile (multiple of 8)


def _round_up(a, m):
    return ((a + m - 1) // m) * m


def _cdiv(a, b):
    return -(-a // b)


def _build_weight_layout():
    """Row layout of the packed (rows, 128) weight slab. Each segment starts on a
    sublane-aligned (multiple-of-8) row so static slices never straddle tiles."""
    segs = [
        ("we1", X_DIM, M_DIMS[1]), ("be1", 1, M_DIMS[1]),        # 64 -> 64
        ("we2", M_DIMS[1], M_DIMS[0]), ("be2", 1, M_DIMS[0]),    # 64 -> 32
        ("we3_mu", M_DIMS[0], C_DIM), ("be3_mu", 1, C_DIM),      # 32 -> 8  (mu head)
        ("we3_lv", M_DIMS[0], C_DIM), ("be3_lv", 1, C_DIM),      # 32 -> 8  (log_var head)
        ("wd1", C_DIM, M_DIMS[0]), ("bd1", 1, M_DIMS[0]),        # 8  -> 32
        ("wd2", M_DIMS[0], M_DIMS[1]), ("bd2", 1, M_DIMS[1]),    # 32 -> 64
        ("wd3", M_DIMS[1], X_DIM), ("bd3", 1, X_DIM),            # 64 -> 64
    ]
    offs = {}
    r = 0
    for name, rows, cols in segs:
        offs[name] = (r, rows, cols)
        r += _round_up(rows, 8)
    return offs, _round_up(r, 8)


_W_OFFS, _W_ROWS = _build_weight_layout()


def gmmvae_kernel(xin_ref, w_ref, out_ref):
    def w(name):
        r, rows, cols = _W_OFFS[name]
        return w_ref[r:r + rows, 0:cols]            # static slices of resident slab

    x = xin_ref[:, IN_X_OFF:IN_X_OFF + X_DIM]
    eps = xin_ref[:, IN_EPS_OFF:IN_EPS_OFF + C_DIM]

    # ---- Encoder MLP: x_dim -> m_dims[::-1] -> 2*c_dim (ReLU except last) ----
    h = jnp.maximum(
        jnp.dot(x, w("we1"), preferred_element_type=jnp.float32) + w("be1"), 0.0)
    h = jnp.maximum(
        jnp.dot(h, w("we2"), preferred_element_type=jnp.float32) + w("be2"), 0.0)

    # split head done host-side: two tiny matmuls -> no cross-lane slice of enc
    mu_c = jnp.dot(h, w("we3_mu"), preferred_element_type=jnp.float32) + w("be3_mu")
    log_var_c = jnp.dot(h, w("we3_lv"), preferred_element_type=jnp.float32) + w("be3_lv")

    # ---- reparameterize (training=True; eps supplied as kernel input) ----
    c = mu_c + eps * jnp.exp(0.5 * log_var_c)

    # ---- Decoder MLP: c_dim -> m_dims -> x_dim (ReLU except last), sigmoid ----
    h = jnp.maximum(
        jnp.dot(c, w("wd1"), preferred_element_type=jnp.float32) + w("bd1"), 0.0)
    h = jnp.maximum(
        jnp.dot(h, w("wd2"), preferred_element_type=jnp.float32) + w("bd2"), 0.0)
    logits = jnp.dot(h, w("wd3"), preferred_element_type=jnp.float32) + w("bd3")
    mu_x = jax.nn.sigmoid(logits)

    # ---- single lane-dense full-width packed output store ----
    tb = mu_x.shape[0]
    out_ref[...] = jnp.concatenate(
        [mu_x, mu_c, log_var_c, c, jnp.zeros((tb, OUT_PAD), jnp.float32)], axis=1)


def init_params(key):
    """Deterministic PyTorch-style (Kaiming-uniform-ish) init. Weights are (in, out)."""
    dims_enc = [X_DIM, M_DIMS[1], M_DIMS[0], 2 * C_DIM]   # m_dims[::-1] + [2*c_dim]
    dims_dec = [C_DIM, M_DIMS[0], M_DIMS[1], X_DIM]       # m_dims + [x_dim]
    params = []
    for dims in (dims_enc, dims_dec):
        for i in range(len(dims) - 1):
            key, k1, k2 = jax.random.split(key, 3)
            bound = 1.0 / float(np.sqrt(dims[i]))
            w = jax.random.uniform(k1, (dims[i], dims[i + 1]), jnp.float32, -bound, bound)
            b = jax.random.uniform(k2, (1, dims[i + 1]), jnp.float32, -bound, bound)
            params += [w, b]
    return params


def pack_params(params):
    """Pack the 12 weight/bias arrays (mu/log_var head split) into one (rows,128) slab.
    Call ONCE per parameter set; the packed slab is what the jitted forward consumes."""
    (we1, be1, we2, be2, we3, be3, wd1, bd1, wd2, bd2, wd3, bd3) = params
    pieces = {
        "we1": we1, "be1": be1, "we2": we2, "be2": be2,
        "we3_mu": we3[:, :C_DIM], "be3_mu": be3[:, :C_DIM],
        "we3_lv": we3[:, C_DIM:2 * C_DIM], "be3_lv": be3[:, C_DIM:2 * C_DIM],
        "wd1": wd1, "bd1": bd1, "wd2": wd2, "bd2": bd2, "wd3": wd3, "bd3": bd3,
    }
    slab = np.zeros((_W_ROWS, LANES), np.float32)
    for name, arr in pieces.items():
        r, rows, cols = _W_OFFS[name]
        slab[r:r + rows, 0:cols] = np.asarray(arr, np.float32).reshape(rows, cols)
    return jnp.asarray(slab)


def _tile_plan(B):
    """Pick (tb, B_pad, n_steps): big tiles to amortize per-step overhead, >=2 steps
    when possible (v7x dual TC), minimal batch-padding waste."""
    B8 = _round_up(max(B, 1), 8)
    n_min = 2 if B8 >= 16 else 1
    n = max(n_min, _cdiv(B8, TB_MAX))
    tb = _round_up(_cdiv(B8, n), 8)
    return tb, n * tb, n


@jax.jit
def gmm_vae_forward_packed(x, eps, w_slab):
    """Returns ((mu_c, log_var_c), (mu_x, log_var_x), c) like BaseVAE.forward."""
    B = x.shape[0]
    tb, B_pad, n = _tile_plan(B)

    # lane-dense (B_pad, 128) input slab: x | eps | zero pad
    xin = jnp.concatenate(
        [x.astype(jnp.float32), eps.astype(jnp.float32),
         jnp.zeros((B, LANES - IN_PAD_OFF), jnp.float32)], axis=1)
    if B_pad != B:
        xin = jnp.pad(xin, ((0, B_pad - B), (0, 0)))

    out = pl.pallas_call(
        gmmvae_kernel,
        out_shape=jax.ShapeDtypeStruct((B_pad, LANES), jnp.float32),
        grid_spec=pltpu.PrefetchScalarGridSpec(
            num_scalar_prefetch=0,
            grid=(n,),
            in_specs=[
                pl.BlockSpec((tb, LANES), lambda i: (i, 0)),           # packed x/eps tile
                pl.BlockSpec((_W_ROWS, LANES), lambda i: (0, 0)),      # weight slab (resident)
            ],
            out_specs=pl.BlockSpec((tb, LANES), lambda i: (i, 0)),
        ),
        compiler_params=pltpu.CompilerParams(
            dimension_semantics=("parallel",)),
    )(xin, w_slab)

    mu_x = out[:B, MU_X_OFF:MU_X_OFF + X_DIM]
    mu_c = out[:B, MU_C_OFF:MU_C_OFF + C_DIM]
    log_var_c = out[:B, LV_C_OFF:LV_C_OFF + C_DIM]
    c = out[:B, C_OFF:C_OFF + C_DIM]
    return (mu_c, log_var_c), (mu_x, LOG_VAR_X), c


def reference_forward(x, eps, params):
    (we1, be1, we2, be2, we3, be3, wd1, bd1, wd2, bd2, wd3, bd3) = params
    h = jax.nn.relu(x @ we1 + be1)
    h = jax.nn.relu(h @ we2 + be2)
    enc = h @ we3 + be3
    mu_c, log_var_c = enc[:, :C_DIM], enc[:, C_DIM:2 * C_DIM]
    c = mu_c + eps * jnp.exp(0.5 * log_var_c)
    h = jax.nn.relu(c @ wd1 + bd1)
    h = jax.nn.relu(h @ wd2 + bd2)
    mu_x = jax.nn.sigmoid(h @ wd3 + bd3)
    return (mu_c, log_var_c), (mu_x, LOG_VAR_X), c


def _check(B, w_slab, params, seed):
    kx, ke = jax.random.split(jax.random.PRNGKey(seed), 2)
    x = jax.random.normal(kx, (B, X_DIM), jnp.float32)
    eps = jax.random.normal(ke, (B, C_DIM), jnp.float32)

    (mu_c, log_var_c), (mu_x, _), c = gmm_vae_forward_packed(x, eps, w_slab)
    jax.block_until_ready((mu_c, log_var_c, mu_x, c))

    (r_mu_c, r_lv_c), (r_mu_x, _), r_c = reference_forward(x, eps, params)
    assert np.allclose(np.asarray(mu_c), np.asarray(r_mu_c), atol=1e-5)
    assert np.allclose(np.asarray(log_var_c), np.asarray(r_lv_c), atol=1e-5)
    assert np.allclose(np.asarray(mu_x), np.asarray(r_mu_x), atol=1e-5)
    assert np.allclose(np.asarray(c), np.asarray(r_c), atol=1e-5)


if __name__ == "__main__":
    params = init_params(jax.random.PRNGKey(0))
    w_slab = pack_params(params)              # packed once, reused for every call
    _check(B=8, w_slab=w_slab, params=params, seed=1)     # single-tile demo batch
    _check(B=300, w_slab=w_slab, params=params, seed=2)   # 2 tiles of 152 rows, 4 pad rows
    print("KERNEL_OK")
</pallas_src>

<mosaic_0001>
module attributes {stable_mosaic.version = 11 : i64} {
  func.func @gmmvae_kernel(%arg0: i32, %arg1: memref<8x128xf32, #tpu.memory_space<vmem>>, %arg2: memref<352x128xf32, #tpu.memory_space<vmem>>, %arg3: memref<8x128xf32, #tpu.memory_space<vmem>>) attributes {dimension_semantics = [#tpu.dimension_semantics<parallel>], iteration_bounds = array<i64: 1>, scalar_prefetch = 0 : i64, scratch_operands = 0 : i64, tpu.core_type = #tpu.core_type<tc>, window_params = [{transform_indices = @transform_0, window_bounds = array<i64: 8, 128>}, {pipeline_mode = #tpu.pipeline_mode<synchronous>, transform_indices = @transform_1, window_bounds = array<i64: 352, 128>}, {transform_indices = @transform_2, window_bounds = array<i64: 8, 128>}]} {
    %c0 = arith.constant 0 : index
    %c0_0 = arith.constant 0 : index
    %0 = vector.load %arg1[%c0, %c0_0] : memref<8x128xf32, #tpu.memory_space<vmem>>, vector<8x64xf32>
    %c0_1 = arith.constant 0 : index
    %c64 = arith.constant 64 : index
    %1 = vector.load %arg1[%c0_1, %c64] : memref<8x128xf32, #tpu.memory_space<vmem>>, vector<8x8xf32>
    %c0_2 = arith.constant 0 : index
    %c0_3 = arith.constant 0 : index
    %2 = vector.load %arg2[%c0_2, %c0_3] : memref<352x128xf32, #tpu.memory_space<vmem>>, vector<64x64xf32>
    %cst = arith.constant dense<0.000000e+00> : vector<8x64xf32>
    %3 = tpu.matmul %0, %2, %cst {dimension_numbers = #tpu.dot_dimension_numbers<[1], [0], [0], [1], [0, 0, 1, 1], [], []>} : vector<8x64xf32>, vector<64x64xf32>, vector<8x64xf32> -> vector<8x64xf32>
    %c64_4 = arith.constant 64 : index
    %c0_5 = arith.constant 0 : index
    %4 = vector.load %arg2[%c64_4, %c0_5] : memref<352x128xf32, #tpu.memory_space<vmem>>, vector<1x64xf32>
    %5 = vector.broadcast %4 : vector<1x64xf32> to vector<8x64xf32>
    %6 = arith.addf %3, %5 : vector<8x64xf32>
    %cst_6 = arith.constant 0.000000e+00 : f32
    %7 = vector.broadcast %cst_6 : f32 to vector<8x64xf32>
    %8 = arith.maximumf %6, %7 : vector<8x64xf32>
    %c72 = arith.constant 72 : index
    %c0_7 = arith.constant 0 : index
    %9 = vector.load %arg2[%c72, %c0_7] : memref<352x128xf32, #tpu.memory_space<vmem>>, vector<64x32xf32>
    %cst_8 = arith.constant dense<0.000000e+00> : vector<8x32xf32>
    %10 = tpu.matmul %8, %9, %cst_8 {dimension_numbers = #tpu.dot_dimension_numbers<[1], [0], [0], [1], [0, 0, 1, 1], [], []>} : vector<8x64xf32>, vector<64x32xf32>, vector<8x32xf32> -> vector<8x32xf32>
    %c136 = arith.constant 136 : index
    %c0_9 = arith.constant 0 : index
    %11 = vector.load %arg2[%c136, %c0_9] : memref<352x128xf32, #tpu.memory_space<vmem>>, vector<1x32xf32>
    %12 = vector.broadcast %11 : vector<1x32xf32> to vector<8x32xf32>
    %13 = arith.addf %10, %12 : vector<8x32xf32>
    %cst_10 = arith.constant 0.000000e+00 : f32
    %14 = vector.broadcast %cst_10 : f32 to vector<8x32xf32>
    %15 = arith.maximumf %13, %14 : vector<8x32xf32>
    %c144 = arith.constant 144 : index
    %c0_11 = arith.constant 0 : index
    %16 = vector.load %arg2[%c144, %c0_11] : memref<352x128xf32, #tpu.memory_space<vmem>>, vector<32x8xf32>
    %cst_12 = arith.constant dense<0.000000e+00> : vector<8x8xf32>
    %17 = tpu.matmul %15, %16, %cst_12 {dimension_numbers = #tpu.dot_dimension_numbers<[1], [0], [0], [1], [0, 0, 1, 1], [], []>} : vector<8x32xf32>, vector<32x8xf32>, vector<8x8xf32> -> vector<8x8xf32>
    %c176 = arith.constant 176 : index
    %c0_13 = arith.constant 0 : index
    %18 = vector.load %arg2[%c176, %c0_13] : memref<352x128xf32, #tpu.memory_space<vmem>>, vector<1x8xf32>
    %19 = vector.broadcast %18 : vector<1x8xf32> to vector<8x8xf32>
    %20 = arith.addf %17, %19 : vector<8x8xf32>
    %c184 = arith.constant 184 : index
    %c0_14 = arith.constant 0 : index
    %21 = vector.load %arg2[%c184, %c0_14] : memref<352x128xf32, #tpu.memory_space<vmem>>, vector<32x8xf32>
    %cst_15 = arith.constant dense<0.000000e+00> : vector<8x8xf32>
    %22 = tpu.matmul %15, %21, %cst_15 {dimension_numbers = #tpu.dot_dimension_numbers<[1], [0], [0], [1], [0, 0, 1, 1], [], []>} : vector<8x32xf32>, vector<32x8xf32>, vector<8x8xf32> -> vector<8x8xf32>
    %c216 = arith.constant 216 : index
    %c0_16 = arith.constant 0 : index
    %23 = vector.load %arg2[%c216, %c0_16] : memref<352x128xf32, #tpu.memory_space<vmem>>, vector<1x8xf32>
    %24 = vector.broadcast %23 : vector<1x8xf32> to vector<8x8xf32>
    %25 = arith.addf %22, %24 : vector<8x8xf32>
    %cst_17 = arith.constant 5.000000e-01 : f32
    %26 = vector.broadcast %cst_17 : f32 to vector<8x8xf32>
    %27 = arith.mulf %26, %25 : vector<8x8xf32>
    %28 = math.exp %27 : vector<8x8xf32>
    %29 = arith.mulf %1, %28 : vector<8x8xf32>
    %30 = arith.addf %20, %29 : vector<8x8xf32>
    %c224 = arith.constant 224 : index
    %c0_18 = arith.constant 0 : index
    %31 = vector.load %arg2[%c224, %c0_18] : memref<352x128xf32, #tpu.memory_space<vmem>>, vector<8x32xf32>
    %cst_19 = arith.constant dense<0.000000e+00> : vector<8x32xf32>
    %32 = tpu.matmul %30, %31, %cst_19 {dimension_numbers = #tpu.dot_dimension_numbers<[1], [0], [0], [1], [0, 0, 1, 1], [], []>} : vector<8x8xf32>, vector<8x32xf32>, vector<8x32xf32> -> vector<8x32xf32>
    %c232 = arith.constant 232 : index
    %c0_20 = arith.constant 0 : index
    %33 = vector.load %arg2[%c232, %c0_20] : memref<352x128xf32, #tpu.memory_space<vmem>>, vector<1x32xf32>
    %34 = vector.broadcast %33 : vector<1x32xf32> to vector<8x32xf32>
    %35 = arith.addf %32, %34 : vector<8x32xf32>
    %cst_21 = arith.constant 0.000000e+00 : f32
    %36 = vector.broadcast %cst_21 : f32 to vector<8x32xf32>
    %37 = arith.maximumf %35, %36 : vector<8x32xf32>
    %c240 = arith.constant 240 : index
    %c0_22 = arith.constant 0 : index
    %38 = vector.load %arg2[%c240, %c0_22] : memref<352x128xf32, #tpu.memory_space<vmem>>, vector<32x64xf32>
    %cst_23 = arith.constant dense<0.000000e+00> : vector<8x64xf32>
    %39 = tpu.matmul %37, %38, %cst_23 {dimension_numbers = #tpu.dot_dimension_numbers<[1], [0], [0], [1], [0, 0, 1, 1], [], []>} : vector<8x32xf32>, vector<32x64xf32>, vector<8x64xf32> -> vector<8x64xf32>
    %c272 = arith.constant 272 : index
    %c0_24 = arith.constant 0 : index
    %40 = vector.load %arg2[%c272, %c0_24] : memref<352x128xf32, #tpu.memory_space<vmem>>, vector<1x64xf32>
    %41 = vector.broadcast %40 : vector<1x64xf32> to vector<8x64xf32>
    %42 = arith.addf %39, %41 : vector<8x64xf32>
    %cst_25 = arith.constant 0.000000e+00 : f32
    %43 = vector.broadcast %cst_25 : f32 to vector<8x64xf32>
    %44 = arith.maximumf %42, %43 : vector<8x64xf32>
    %c280 = arith.constant 280 : index
    %c0_26 = arith.constant 0 : index
    %45 = vector.load %arg2[%c280, %c0_26] : memref<352x128xf32, #tpu.memory_space<vmem>>, vector<64x64xf32>
    %cst_27 = arith.constant dense<0.000000e+00> : vector<8x64xf32>
    %46 = tpu.matmul %44, %45, %cst_27 {dimension_numbers = #tpu.dot_dimension_numbers<[1], [0], [0], [1], [0, 0, 1, 1], [], []>} : vector<8x64xf32>, vector<64x64xf32>, vector<8x64xf32> -> vector<8x64xf32>
    %c344 = arith.constant 344 : index
    %c0_28 = arith.constant 0 : index
    %47 = vector.load %arg2[%c344, %c0_28] : memref<352x128xf32, #tpu.memory_space<vmem>>, vector<1x64xf32>
    %48 = vector.broadcast %47 : vector<1x64xf32> to vector<8x64xf32>
    %49 = arith.addf %46, %48 : vector<8x64xf32>
    %50 = arith.negf %49 : vector<8x64xf32>
    %51 = math.exp %50 : vector<8x64xf32>
    %cst_29 = arith.constant 1.000000e+00 : f32
    %52 = vector.broadcast %cst_29 : f32 to vector<8x64xf32>
    %53 = arith.addf %52, %51 : vector<8x64xf32>
    %54 = arith.divf %52, %53 : vector<8x64xf32>
    %cst_30 = arith.constant 0.000000e+00 : f32
    %55 = vector.broadcast %cst_30 : f32 to vector<8x40xf32>
    %56 = tpu.concatenate %54, %20, %25, %30, %55 in 1 : vector<8x64xf32>, vector<8x8xf32>, vector<8x8xf32>, vector<8x8xf32>, vector<8x40xf32> -> vector<8x128xf32>
    %c0_31 = arith.constant 0 : index
    %c0_32 = arith.constant 0 : index
    %57 = vector.load %arg3[%c0_31, %c0_32] : memref<8x128xf32, #tpu.memory_space<vmem>>, vector<8x128xf32>
    tpu.vector_store %arg3[%c0_31, %c0_32], %56 {strides = array<i32>} : memref<8x128xf32, #tpu.memory_space<vmem>>, vector<8x128xf32>,
    return
  }
  func.func @transform_0(%arg0: i32) -> (i32, i32) {
    %c0_i32 = arith.constant 0 : i32
    %c0_i32_0 = arith.constant 0 : i32
    return %arg0, %c0_i32 : i32, i32
  }
  func.func @transform_1(%arg0: i32) -> (i32, i32) {
    %c0_i32 = arith.constant 0 : i32
    %c0_i32_0 = arith.constant 0 : i32
    %c0_i32_1 = arith.constant 0 : i32
    return %c0_i32, %c0_i32_0 : i32, i32
  }
  func.func @transform_2(%arg0: i32) -> (i32, i32) {
    %c0_i32 = arith.constant 0 : i32
    %c0_i32_0 = arith.constant 0 : i32
    return %arg0, %c0_i32 : i32, i32
  }
}

</mosaic_0001>

<llo_original>
// kernel: gmm_vae_forward_packed.1
$region0: #{gmm_vae_forward_packed.1}
  #allocation0 [shape = 'u32[]', space=smem, size = 0x4, offset = 0x4, fixed_abs, tag = 'smem constant byte address 0x4 - core index']
  #allocation1 [shape = 'u32[144,128]{1,0:T(1,128)}', space=vmem, size = 0x12000, scoped, tag = 'internal scratch']
  %s0 = inlined_call_operand.vmem [shape: f32[8,128], index: 0, kind: input, shape index: {}]
  %s1 = inlined_call_operand.hbm [shape: f32[352,128], index: 1, kind: input, shape index: {}]
  %s2 = inlined_call_operand.vmem [shape: f32[8,128], index: 2, kind: output, shape index: {}]
  %s3 = sld [smem:[#allocation0]]
  $region22: #{gmm_vae_forward_packed.1} parent=0
    _
  %s5 = ssub.s32 1, %s3
  %s6 = scalar_select 0, %s5, %s3
  $region1: #{gmm_vae_forward_packed.1} parent=0
    #allocation2 [shape = 'u8[180224]{0}', space=vmem, size = 0x2c000, scoped, tag = 'input window, operand 1, single buffered']
    #allocation3 [shape = 's32[1]{0}', space=sflag, size = 0x4, scoped, tag = 'scoped memory for gmm_vae_forward_packed.1']
    %7 = vsyncpa [#allocation3], 0
    // Predicated region
    $region2: #{gmm_vae_forward_packed.1} parent=1 // pred_check
      _
    $region3: #{gmm_vae_forward_packed.1} parent=1 // pred_check_branch
      %9 = sbr.rel (0) target = $region5
    $region4: #{gmm_vae_forward_packed.1} parent=1 // pred_region
      _
    $region5: #{gmm_vae_forward_packed.1} parent=1 // pred_fallthru
      _
    // Predicated region
    $region6: #{gmm_vae_forward_packed.1} parent=1 // pred_check
      _
    $region7: #{gmm_vae_forward_packed.1} parent=1 // pred_check_branch
      %11 = sbr.rel (0) target = $region9
    $region8: #{gmm_vae_forward_packed.1} parent=1 // pred_region
      %s13 = ssub.s32 5632, 5632
      %14 = vsyncadd [#allocation3], %s13
      %s15 = sshll.u32 [#allocation2], 4
      %s16 = int_to_ptr.vmem [resolvable:$true] %s15
      %21 = dma.hbm_to_vmem [thread:$0]  %s1, 5632, %s16, [#allocation3], 128, 128, 8
    $region9: #{gmm_vae_forward_packed.1} parent=1 // pred_fallthru
      _
    // Predicated region
    $region10: #{gmm_vae_forward_packed.1} parent=1 // pred_check
      _
    $region11: #{gmm_vae_forward_packed.1} parent=1 // pred_check_branch
      %23 = sbr.rel (0) target = $region13
    $region12: #{gmm_vae_forward_packed.1} parent=1 // pred_region
      %24 = dma.done [#allocation3], 5632
    $region13: #{gmm_vae_forward_packed.1} parent=1 // pred_fallthru
      _
    %v25 = vld [vmem:[%s0] sm:$0xff]
    %v26 = vld [vmem:[#allocation2] sm:$0xff]
    %v27 = vld [vmem:[#allocation2 + $0x8] sm:$0xff]
    %v28 = vld [vmem:[#allocation2 + $0x10] sm:$0xff]
    %v29 = vld [vmem:[#allocation2 + $0x18] sm:$0xff]
    %v30 = vld [vmem:[#allocation2 + $0x20] sm:$0xff]
    %v31 = vld [vmem:[#allocation2 + $0x28] sm:$0xff]
    %v32 = vld [vmem:[#allocation2 + $0x30] sm:$0xff]
    %v33 = vld [vmem:[#allocation2 + $0x38] sm:$0xff]
    %v34 = vld [vmem:[#allocation2 + $0x40] sm:$0x1]
    %v35 = vlaneseq
    %v36 = vshrl.u32 %v35, 7
    %v37 = vsub.s32 0, %v36
    %v38 = vrot.slane %v34, %v37
    %vm39 = vcmask 523264
    %v41 = vsel %vm39, %v25, 0
    %43 = vmatprep.subr.mxu0 0.0
    %44 = vmatpush1.msra.mxu0 %v26
    %45 = vmatprep.subr.mxu0 0.0
    %46 = vmatpush1.msra.mxu0 %v27
    %47 = vmatprep.subr.mxu0 0.0
    %48 = vmatpush1.msra.mxu0 %v28
    %49 = vmatprep.subr.mxu0 0.0
    %50 = vmatpush1.msra.mxu0 %v29
    %51 = vmatprep.subr.mxu0 0.0
    %52 = vmatpush1.msra.mxu0 %v30
    %53 = vmatprep.subr.mxu0 0.0
    %54 = vmatpush1.msra.mxu0 %v31
    %55 = vmatprep.subr.mxu0 0.0
    %56 = vmatpush1.msra.mxu0 %v32
    %57 = vmatprep.subr.mxu0 0.0
    %58 = vmatpush1.msra.mxu0 %v33
    %59 = vmatprep.subr.mxu0 0.0
    %60 = vmatpush1.msra.mxu0 0.0
    %61 = vmatprep.subr.mxu0 0.0
    %62 = vmatpush1.msra.mxu0 0.0
    %63 = vmatprep.subr.mxu0 0.0
    %64 = vmatpush1.msra.mxu0 0.0
    %65 = vmatprep.subr.mxu0 0.0
    %66 = vmatpush1.msra.mxu0 0.0
    %67 = vmatprep.subr.mxu0 0.0
    %68 = vmatpush1.msra.mxu0 0.0
    %69 = vmatprep.subr.mxu0 0.0
    %70 = vmatpush1.msra.mxu0 0.0
    %71 = vmatprep.subr.mxu0 0.0
    %72 = vmatpush1.msra.mxu0 0.0
    %73 = vmatprep.subr.mxu0 0.0
    %74 = vmatpush1.msra.mxu0 0.0
    %75 = vmatprep.subr.mxu0 0.0
    %76 = vmatpush1.msra.mxu0 0.0
    %77 = vmatprep.subr.mxu0 0.0
    %78 = vmatpush1.msra.mxu0 0.0
    %79 = vmatprep.subr.mxu0 0.0
    %80 = vmatpush1.msra.mxu0 0.0
    %81 = vmatprep.subr.mxu0 0.0
    %82 = vmatpush1.msra.mxu0 0.0
    %83 = vmatprep.subr.mxu0 0.0
    %84 = vmatpush1.msra.mxu0 0.0
    %85 = vmatprep.subr.mxu0 0.0
    %86 = vmatpush1.msra.mxu0 0.0
    %87 = vmatprep.subr.mxu0 0.0
    %88 = vmatpush1.msra.mxu0 0.0
    %89 = vmatprep.subr.mxu0 0.0
    %90 = vmatpush1.msra.mxu0 0.0
    %91 = vmatprep.subr.mxu0 0.0
    %92 = vmatpush1.msra.mxu0 0.0
    %93 = vmatprep.subr.mxu0 0.0
    %94 = vmatpush1.msra.mxu0 0.0
    %95 = vmatprep.subr.mxu0 0.0
    %96 = vmatpush1.msra.mxu0 0.0
    %97 = vmatprep.subr.mxu0 0.0
    %98 = vmatpush1.msra.mxu0 0.0
    %99 = vmatprep.subr.mxu0 0.0
    %100 = vmatpush1.msra.mxu0 0.0
    %101 = vmatprep.subr.mxu0 0.0
    %102 = vmatpush1.msra.mxu0 0.0
    %103 = vmatprep.subr.mxu0 0.0
    %104 = vmatpush1.msra.mxu0 0.0
    %105 = vmatprep.subr.mxu0 0.0
    %106 = vmatpush1.msra.mxu0 0.0
    %107 = vmatprep.mubr.f32.mxu0 0.0
    %108 = vmatmul.mubr.f32.gmra.mrb[0].mxu0 %v41
    %v109 = vpop.f32.mrb[0].mxu0
    %v110 = vadd.f32 %v38, %v109
    %v111 = vpop.f32.mrb[0].mxu0
    %112 = vdwg.mxu0
    %v113 = vmax.f32 %v110, 0.0
    %v114 = vld [vmem:[#allocation2 + $0x48] sm:$0xff]
    %v115 = vld [vmem:[#allocation2 + $0x50] sm:$0xff]
    %v116 = vld [vmem:[#allocation2 + $0x58] sm:$0xff]
    %v117 = vld [vmem:[#allocation2 + $0x60] sm:$0xff]
    %v118 = vld [vmem:[#allocation2 + $0x68] sm:$0xff]
    %v119 = vld [vmem:[#allocation2 + $0x70] sm:$0xff]
    %v120 = vld [vmem:[#allocation2 + $0x78] sm:$0xff]
    %v121 = vld [vmem:[#allocation2 + $0x80] sm:$0xff]
    %v122 = vld [vmem:[#allocation2 + $0x88] sm:$0x1]
    %v123 = vlaneseq
    %v124 = vshrl.u32 %v123, 7
    %v125 = vsub.s32 0, %v124
    %v126 = vrot.slane %v122, %v125
    %v128 = vsel %vm39, %v113, 0
    %130 = vmatprep.subr.mxu0 0.0
    %131 = vmatpush1.msra.mxu0 %v114
    %132 = vmatprep.subr.mxu0 0.0
    %133 = vmatpush1.msra.mxu0 %v115
    %134 = vmatprep.subr.mxu0 0.0
    %135 = vmatpush1.msra.mxu0 %v116
    %136 = vmatprep.subr.mxu0 0.0
    %137 = vmatpush1.msra.mxu0 %v117
    %138 = vmatprep.subr.mxu0 0.0
    %139 = vmatpush1.msra.mxu0 %v118
    %140 = vmatprep.subr.mxu0 0.0
    %141 = vmatpush1.msra.mxu0 %v119
    %142 = vmatprep.subr.mxu0 0.0
    %143 = vmatpush1.msra.mxu0 %v120
    %144 = vmatprep.subr.mxu0 0.0
    %145 = vmatpush1.msra.mxu0 %v121
    %146 = vmatprep.subr.mxu0 0.0
    %147 = vmatpush1.msra.mxu0 0.0
    %148 = vmatprep.subr.mxu0 0.0
    %149 = vmatpush1.msra.mxu0 0.0
    %150 = vmatprep.subr.mxu0 0.0
    %151 = vmatpush1.msra.mxu0 0.0
    %152 = vmatprep.subr.mxu0 0.0
    %153 = vmatpush1.msra.mxu0 0.0
    %154 = vmatprep.subr.mxu0 0.0
    %155 = vmatpush1.msra.mxu0 0.0
    %156 = vmatprep.subr.mxu0 0.0
    %157 = vmatpush1.msra.mxu0 0.0
    %158 = vmatprep.subr.mxu0 0.0
    %159 = vmatpush1.msra.mxu0 0.0
    %160 = vmatprep.subr.mxu0 0.0
    %161 = vmatpush1.msra.mxu0 0.0
    %162 = vmatprep.subr.mxu0 0.0
    %163 = vmatpush1.msra.mxu0 0.0
    %164 = vmatprep.subr.mxu0 0.0
    %165 = vmatpush1.msra.mxu0 0.0
    %166 = vmatprep.subr.mxu0 0.0
    %167 = vmatpush1.msra.mxu0 0.0
    %168 = vmatprep.subr.mxu0 0.0
    %169 = vmatpush1.msra.mxu0 0.0
    %170 = vmatprep.subr.mxu0 0.0
    %171 = vmatpush1.msra.mxu0 0.0
    %172 = vmatprep.subr.mxu0 0.0
    %173 = vmatpush1.msra.mxu0 0.0
    %174 = vmatprep.subr.mxu0 0.0
    %175 = vmatpush1.msra.mxu0 0.0
    %176 = vmatprep.subr.mxu0 0.0
    %177 = vmatpush1.msra.mxu0 0.0
    %178 = vmatprep.subr.mxu0 0.0
    %179 = vmatpush1.msra.mxu0 0.0
    %180 = vmatprep.subr.mxu0 0.0
    %181 = vmatpush1.msra.mxu0 0.0
    %182 = vmatprep.subr.mxu0 0.0
    %183 = vmatpush1.msra.mxu0 0.0
    %184 = vmatprep.subr.mxu0 0.0
    %185 = vmatpush1.msra.mxu0 0.0
    %186 = vmatprep.subr.mxu0 0.0
    %187 = vmatpush1.msra.mxu0 0.0
    %188 = vmatprep.subr.mxu0 0.0
    %189 = vmatpush1.msra.mxu0 0.0
    %190 = vmatprep.subr.mxu0 0.0
    %191 = vmatpush1.msra.mxu0 0.0
    %192 = vmatprep.subr.mxu0 0.0
    %193 = vmatpush1.msra.mxu0 0.0
    %194 = vmatprep.mubr.f32.mxu0 0.0
    %195 = vmatmul.mubr.f32.gmra.mrb[0].mxu0 %v128
    %v196 = vpop.f32.mrb[0].mxu0
    %v197 = vadd.f32 %v126, %v196
    %v198 = vpop.f32.mrb[0].mxu0
    %199 = vdwg.mxu0
    %v200 = vmax.f32 %v197, 0.0
    %v201 = vld [vmem:[#allocation2 + $0x90] sm:$0xff]
    %v202 = vld [vmem:[#allocation2 + $0x98] sm:$0xff]
    %v203 = vld [vmem:[#allocation2 + $0xa0] sm:$0xff]
    %v204 = vld [vmem:[#allocation2 + $0xa8] sm:$0xff]
    %v205 = vld [vmem:[#allocation2 + $0xb0] sm:$0x1]
    %v206 = vlaneseq
    %v207 = vshrl.u32 %v206, 7
    %v208 = vsub.s32 0, %v207
    %v209 = vrot.slane %v205, %v208
    %vm210 = vcmask 261120
    %v212 = vsel %vm210, %v200, 0
    %214 = vmatprep.subr.mxu0 0.0
    %215 = vmatpush1.msra.mxu0 %v201
    %216 = vmatprep.subr.mxu0 0.0
    %217 = vmatpush1.msra.mxu0 %v202
    %218 = vmatprep.subr.mxu0 0.0
    %219 = vmatpush1.msra.mxu0 %v203
    %220 = vmatprep.subr.mxu0 0.0
    %221 = vmatpush1.msra.mxu0 %v204
    %222 = vmatprep.subr.mxu0 0.0
    %223 = vmatpush1.msra.mxu0 0.0
    %224 = vmatprep.subr.mxu0 0.0
    %225 = vmatpush1.msra.mxu0 0.0
    %226 = vmatprep.subr.mxu0 0.0
    %227 = vmatpush1.msra.mxu0 0.0
    %228 = vmatprep.subr.mxu0 0.0
    %229 = vmatpush1.msra.mxu0 0.0
    %230 = vmatprep.subr.mxu0 0.0
    %231 = vmatpush1.msra.mxu0 0.0
    %232 = vmatprep.subr.mxu0 0.0
    %233 = vmatpush1.msra.mxu0 0.0
    %234 = vmatprep.subr.mxu0 0.0
    %235 = vmatpush1.msra.mxu0 0.0
    %236 = vmatprep.subr.mxu0 0.0
    %237 = vmatpush1.msra.mxu0 0.0
    %238 = vmatprep.subr.mxu0 0.0
    %239 = vmatpush1.msra.mxu0 0.0
    %240 = vmatprep.subr.mxu0 0.0
    %241 = vmatpush1.msra.mxu0 0.0
    %242 = vmatprep.subr.mxu0 0.0
    %243 = vmatpush1.msra.mxu0 0.0
    %244 = vmatprep.subr.mxu0 0.0
    %245 = vmatpush1.msra.mxu0 0.0
    %246 = vmatprep.subr.mxu0 0.0
    %247 = vmatpush1.msra.mxu0 0.0
    %248 = vmatprep.subr.mxu0 0.0
    %249 = vmatpush1.msra.mxu0 0.0
    %250 = vmatprep.subr.mxu0 0.0
    %251 = vmatpush1.msra.mxu0 0.0
    %252 = vmatprep.subr.mxu0 0.0
    %253 = vmatpush1.msra.mxu0 0.0
    %254 = vmatprep.subr.mxu0 0.0
    %255 = vmatpush1.msra.mxu0 0.0
    %256 = vmatprep.subr.mxu0 0.0
    %257 = vmatpush1.msra.mxu0 0.0
    %258 = vmatprep.subr.mxu0 0.0
    %259 = vmatpush1.msra.mxu0 0.0
    %260 = vmatprep.subr.mxu0 0.0
    %261 = vmatpush1.msra.mxu0 0.0
    %262 = vmatprep.subr.mxu0 0.0
    %263 = vmatpush1.msra.mxu0 0.0
    %264 = vmatprep.subr.mxu0 0.0
    %265 = vmatpush1.msra.mxu0 0.0
    %266 = vmatprep.subr.mxu0 0.0
    %267 = vmatpush1.msra.mxu0 0.0
    %268 = vmatprep.subr.mxu0 0.0
    %269 = vmatpush1.msra.mxu0 0.0
    %270 = vmatprep.subr.mxu0 0.0
    %271 = vmatpush1.msra.mxu0 0.0
    %272 = vmatprep.subr.mxu0 0.0
    %273 = vmatpush1.msra.mxu0 0.0
    %274 = vmatprep.subr.mxu0 0.0
    %275 = vmatpush1.msra.mxu0 0.0
    %276 = vmatprep.subr.mxu0 0.0
    %277 = vmatpush1.msra.mxu0 0.0
    %278 = vmatprep.mubr.f32.mxu0 0.0
    %279 = vmatmul.mubr.f32.gmra.mrb[0].mxu0 %v212
    %v280 = vpop.f32.mrb[0].mxu0
    %v281 = vadd.f32 %v209, %v280
    %v282 = vpop.f32.mrb[0].mxu0
    %283 = vdwg.mxu0
    %v284 = vld [vmem:[#allocation2 + $0xb8] sm:$0xff]
    %v285 = vld [vmem:[#allocation2 + $0xc0] sm:$0xff]
    %v286 = vld [vmem:[#allocation2 + $0xc8] sm:$0xff]
    %v287 = vld [vmem:[#allocation2 + $0xd0] sm:$0xff]
    %v288 = vld [vmem:[#allocation2 + $0xd8] sm:$0x1]
    %v289 = vlaneseq
    %v290 = vshrl.u32 %v289, 7
    %v291 = vsub.s32 0, %v290
    %v292 = vrot.slane %v288, %v291
    %293 = vmatprep.subr.mxu0 0.0
    %294 = vmatpush1.msra.mxu0 %v284
    %295 = vmatprep.subr.mxu0 0.0
    %296 = vmatpush1.msra.mxu0 %v285
    %297 = vmatprep.subr.mxu0 0.0
    %298 = vmatpush1.msra.mxu0 %v286
    %299 = vmatprep.subr.mxu0 0.0
    %300 = vmatpush1.msra.mxu0 %v287
    %301 = vmatprep.subr.mxu0 0.0
    %302 = vmatpush1.msra.mxu0 0.0
    %303 = vmatprep.subr.mxu0 0.0
    %304 = vmatpush1.msra.mxu0 0.0
    %305 = vmatprep.subr.mxu0 0.0
    %306 = vmatpush1.msra.mxu0 0.0
    %307 = vmatprep.subr.mxu0 0.0
    %308 = vmatpush1.msra.mxu0 0.0
    %309 = vmatprep.subr.mxu0 0.0
    %310 = vmatpush1.msra.mxu0 0.0
    %311 = vmatprep.subr.mxu0 0.0
    %312 = vmatpush1.msra.mxu0 0.0
    %313 = vmatprep.subr.mxu0 0.0
    %314 = vmatpush1.msra.mxu0 0.0
    %315 = vmatprep.subr.mxu0 0.0
    %316 = vmatpush1.msra.mxu0 0.0
    %317 = vmatprep.subr.mxu0 0.0
    %318 = vmatpush1.msra.mxu0 0.0
    %319 = vmatprep.subr.mxu0 0.0
    %320 = vmatpush1.msra.mxu0 0.0
    %321 = vmatprep.subr.mxu0 0.0
    %322 = vmatpush1.msra.mxu0 0.0
    %323 = vmatprep.subr.mxu0 0.0
    %324 = vmatpush1.msra.mxu0 0.0
    %325 = vmatprep.subr.mxu0 0.0
    %326 = vmatpush1.msra.mxu0 0.0
    %327 = vmatprep.subr.mxu0 0.0
    %328 = vmatpush1.msra.mxu0 0.0
    %329 = vmatprep.subr.mxu0 0.0
    %330 = vmatpush1.msra.mxu0 0.0
    %331 = vmatprep.subr.mxu0 0.0
    %332 = vmatpush1.msra.mxu0 0.0
    %333 = vmatprep.subr.mxu0 0.0
    %334 = vmatpush1.msra.mxu0 0.0
    %335 = vmatprep.subr.mxu0 0.0
    %336 = vmatpush1.msra.mxu0 0.0
    %337 = vmatprep.subr.mxu0 0.0
    %338 = vmatpush1.msra.mxu0 0.0
    %339 = vmatprep.subr.mxu0 0.0
    %340 = vmatpush1.msra.mxu0 0.0
    %341 = vmatprep.subr.mxu0 0.0
    %342 = vmatpush1.msra.mxu0 0.0
    %343 = vmatprep.subr.mxu0 0.0
    %344 = vmatpush1.msra.mxu0 0.0
    %345 = vmatprep.subr.mxu0 0.0
    %346 = vmatpush1.msra.mxu0 0.0
    %347 = vmatprep.subr.mxu0 0.0
    %348 = vmatpush1.msra.mxu0 0.0
    %349 = vmatprep.subr.mxu0 0.0
    %350 = vmatpush1.msra.mxu0 0.0
    %351 = vmatprep.subr.mxu0 0.0
    %352 = vmatpush1.msra.mxu0 0.0
    %353 = vmatprep.subr.mxu0 0.0
    %354 = vmatpush1.msra.mxu0 0.0
    %355 = vmatprep.subr.mxu0 0.0
    %356 = vmatpush1.msra.mxu0 0.0
    %357 = vmatprep.mubr.f32.mxu0 0.0
    %358 = vmatmul.mubr.f32.gmra.mrb[0].mxu0 %v212
    %v359 = vpop.f32.mrb[0].mxu0
    %v360 = vadd.f32 %v292, %v359
    %v361 = vpop.f32.mrb[0].mxu0
    %362 = vdwg.mxu0
    %v363 = vmul.f32 %v360, 0.5
    %v364 = vmul.f32 %v363, 1.442695
    %v365 = vpow.pop %v364
    %367 = vrot.lane.b32.xlu0 %v365, 64
    %v368 = vpop.permute.xlu0 %367
    %v370 = vmul.f32 %v25, %v368
    %372 = vrot.lane.b32.xlu0 %v370, 64
    %v373 = vpop.permute.xlu0 %372
    %v375 = vadd.f32 %v281, %v373
    %v376 = vld [vmem:[#allocation2 + $0xe0] sm:$0xff]
    %v377 = vld [vmem:[#allocation2 + $0xe8] sm:$0x1]
    %v378 = vlaneseq
    %v379 = vshrl.u32 %v378, 7
    %v380 = vsub.s32 0, %v379
    %v381 = vrot.slane %v377, %v380
    %vm382 = vcmask 64512
    %v384 = vsel %vm382, %v375, 0
    %386 = vmatprep.subr.mxu0 0.0
    %387 = vmatpush1.msra.mxu0 %v376
    %388 = vmatprep.subr.mxu0 0.0
    %389 = vmatpush1.msra.mxu0 0.0
    %390 = vmatprep.subr.mxu0 0.0
    %391 = vmatpush1.msra.mxu0 0.0
    %392 = vmatprep.subr.mxu0 0.0
    %393 = vmatpush1.msra.mxu0 0.0
    %394 = vmatprep.subr.mxu0 0.0
    %395 = vmatpush1.msra.mxu0 0.0
    %396 = vmatprep.subr.mxu0 0.0
    %397 = vmatpush1.msra.mxu0 0.0
    %398 = vmatprep.subr.mxu0 0.0
    %399 = vmatpush1.msra.mxu0 0.0
    %400 = vmatprep.subr.mxu0 0.0
    %401 = vmatpush1.msra.mxu0 0.0
    %402 = vmatprep.subr.mxu0 0.0
    %403 = vmatpush1.msra.mxu0 0.0
    %404 = vmatprep.subr.mxu0 0.0
    %405 = vmatpush1.msra.mxu0 0.0
    %406 = vmatprep.subr.mxu0 0.0
    %407 = vmatpush1.msra.mxu0 0.0
    %408 = vmatprep.subr.mxu0 0.0
    %409 = vmatpush1.msra.mxu0 0.0
    %410 = vmatprep.subr.mxu0 0.0
    %411 = vmatpush1.msra.mxu0 0.0
    %412 = vmatprep.subr.mxu0 0.0
    %413 = vmatpush1.msra.mxu0 0.0
    %414 = vmatprep.subr.mxu0 0.0
    %415 = vmatpush1.msra.mxu0 0.0
    %416 = vmatprep.subr.mxu0 0.0
    %417 = vmatpush1.msra.mxu0 0.0
    %418 = vmatprep.subr.mxu0 0.0
    %419 = vmatpush1.msra.mxu0 0.0
    %420 = vmatprep.subr.mxu0 0.0
    %421 = vmatpush1.msra.mxu0 0.0
    %422 = vmatprep.subr.mxu0 0.0
    %423 = vmatpush1.msra.mxu0 0.0
    %424 = vmatprep.subr.mxu0 0.0
    %425 = vmatpush1.msra.mxu0 0.0
    %426 = vmatprep.subr.mxu0 0.0
    %427 = vmatpush1.msra.mxu0 0.0
    %428 = vmatprep.subr.mxu0 0.0
    %429 = vmatpush1.msra.mxu0 0.0
    %430 = vmatprep.subr.mxu0 0.0
    %431 = vmatpush1.msra.mxu0 0.0
    %432 = vmatprep.subr.mxu0 0.0
    %433 = vmatpush1.msra.mxu0 0.0
    %434 = vmatprep.subr.mxu0 0.0
    %435 = vmatpush1.msra.mxu0 0.0
    %436 = vmatprep.subr.mxu0 0.0
    %437 = vmatpush1.msra.mxu0 0.0
    %438 = vmatprep.subr.mxu0 0.0
    %439 = vmatpush1.msra.mxu0 0.0
    %440 = vmatprep.subr.mxu0 0.0
    %441 = vmatpush1.msra.mxu0 0.0
    %442 = vmatprep.subr.mxu0 0.0
    %443 = vmatpush1.msra.mxu0 0.0
    %444 = vmatprep.subr.mxu0 0.0
    %445 = vmatpush1.msra.mxu0 0.0
    %446 = vmatprep.subr.mxu0 0.0
    %447 = vmatpush1.msra.mxu0 0.0
    %448 = vmatprep.subr.mxu0 0.0
    %449 = vmatpush1.msra.mxu0 0.0
    %450 = vmatprep.mubr.f32.mxu0 0.0
    %451 = vmatmul.mubr.f32.gmra.mrb[0].mxu0 %v384
    %v452 = vpop.f32.mrb[0].mxu0
    %v453 = vadd.f32 %v381, %v452
    %v454 = vpop.f32.mrb[0].mxu0
    %455 = vdwg.mxu0
    %v456 = vmax.f32 %v453, 0.0
    %v457 = vld [vmem:[#allocation2 + $0xf0] sm:$0xff]
    %v458 = vld [vmem:[#allocation2 + $0xf8] sm:$0xff]
    %v459 = vld [vmem:[#allocation2 + $0x100] sm:$0xff]
    %v460 = vld [vmem:[#allocation2 + $0x108] sm:$0xff]
    %v461 = vld [vmem:[#allocation2 + $0x110] sm:$0x1]
    %v462 = vlaneseq
    %v463 = vshrl.u32 %v462, 7
    %v464 = vsub.s32 0, %v463
    %v465 = vrot.slane %v461, %v464
    %v467 = vsel %vm210, %v456, 0
    %469 = vmatprep.subr.mxu0 0.0
    %470 = vmatpush1.msra.mxu0 %v457
    %471 = vmatprep.subr.mxu0 0.0
    %472 = vmatpush1.msra.mxu0 %v458
    %473 = vmatprep.subr.mxu0 0.0
    %474 = vmatpush1.msra.mxu0 %v459
    %475 = vmatprep.subr.mxu0 0.0
    %476 = vmatpush1.msra.mxu0 %v460
    %477 = vmatprep.subr.mxu0 0.0
    %478 = vmatpush1.msra.mxu0 0.0
    %479 = vmatprep.subr.mxu0 0.0
    %480 = vmatpush1.msra.mxu0 0.0
    %481 = vmatprep.subr.mxu0 0.0
    %482 = vmatpush1.msra.mxu0 0.0
    %483 = vmatprep.subr.mxu0 0.0
    %484 = vmatpush1.msra.mxu0 0.0
    %485 = vmatprep.subr.mxu0 0.0
    %486 = vmatpush1.msra.mxu0 0.0
    %487 = vmatprep.subr.mxu0 0.0
    %488 = vmatpush1.msra.mxu0 0.0
    %489 = vmatprep.subr.mxu0 0.0
    %490 = vmatpush1.msra.mxu0 0.0
    %491 = vmatprep.subr.mxu0 0.0
    %492 = vmatpush1.msra.mxu0 0.0
    %493 = vmatprep.subr.mxu0 0.0
    %494 = vmatpush1.msra.mxu0 0.0
    %495 = vmatprep.subr.mxu0 0.0
    %496 = vmatpush1.msra.mxu0 0.0
    %497 = vmatprep.subr.mxu0 0.0
    %498 = vmatpush1.msra.mxu0 0.0
    %499 = vmatprep.subr.mxu0 0.0
    %500 = vmatpush1.msra.mxu0 0.0
    %501 = vmatprep.subr.mxu0 0.0
    %502 = vmatpush1.msra.mxu0 0.0
    %503 = vmatprep.subr.mxu0 0.0
    %504 = vmatpush1.msra.mxu0 0.0
    %505 = vmatprep.subr.mxu0 0.0
    %506 = vmatpush1.msra.mxu0 0.0
    %507 = vmatprep.subr.mxu0 0.0
    %508 = vmatpush1.msra.mxu0 0.0
    %509 = vmatprep.subr.mxu0 0.0
    %510 = vmatpush1.msra.mxu0 0.0
    %511 = vmatprep.subr.mxu0 0.0
    %512 = vmatpush1.msra.mxu0 0.0
    %513 = vmatprep.subr.mxu0 0.0
    %514 = vmatpush1.msra.mxu0 0.0
    %515 = vmatprep.subr.mxu0 0.0
    %516 = vmatpush1.msra.mxu0 0.0
    %517 = vmatprep.subr.mxu0 0.0
    %518 = vmatpush1.msra.mxu0 0.0
    %519 = vmatprep.subr.mxu0 0.0
    %520 = vmatpush1.msra.mxu0 0.0
    %521 = vmatprep.subr.mxu0 0.0
    %522 = vmatpush1.msra.mxu0 0.0
    %523 = vmatprep.subr.mxu0 0.0
    %524 = vmatpush1.msra.mxu0 0.0
    %525 = vmatprep.subr.mxu0 0.0
    %526 = vmatpush1.msra.mxu0 0.0
    %527 = vmatprep.subr.mxu0 0.0
    %528 = vmatpush1.msra.mxu0 0.0
    %529 = vmatprep.subr.mxu0 0.0
    %530 = vmatpush1.msra.mxu0 0.0
    %531 = vmatprep.subr.mxu0 0.0
    %532 = vmatpush1.msra.mxu0 0.0
    %533 = vmatprep.mubr.f32.mxu0 0.0
    %534 = vmatmul.mubr.f32.gmra.mrb[0].mxu0 %v467
    %v535 = vpop.f32.mrb[0].mxu0
    %v536 = vadd.f32 %v465, %v535
    %v537 = vpop.f32.mrb[0].mxu0
    %538 = vdwg.mxu0
    %v539 = vmax.f32 %v536, 0.0
    %v540 = vld [vmem:[#allocation2 + $0x118] sm:$0xff]
    %v541 = vld [vmem:[#allocation2 + $0x120] sm:$0xff]
    %v542 = vld [vmem:[#allocation2 + $0x128] sm:$0xff]
    %v543 = vld [vmem:[#allocation2 + $0x130] sm:$0xff]
    %v544 = vld [vmem:[#allocation2 + $0x138] sm:$0xff]
    %v545 = vld [vmem:[#allocation2 + $0x140] sm:$0xff]
    %v546 = vld [vmem:[#allocation2 + $0x148] sm:$0xff]
    %v547 = vld [vmem:[#allocation2 + $0x150] sm:$0xff]
    %v548 = vld [vmem:[#allocation2 + $0x158] sm:$0x1]
    %v549 = vlaneseq
    %v550 = vshrl.u32 %v549, 7
    %v551 = vsub.s32 0, %v550
    %v552 = vrot.slane %v548, %v551
    %v554 = vsel %vm39, %v539, 0
    %556 = vmatprep.subr.mxu0 0.0
    %557 = vmatpush1.msra.mxu0 %v540
    %558 = vmatprep.subr.mxu0 0.0
    %559 = vmatpush1.msra.mxu0 %v541
    %560 = vmatprep.subr.mxu0 0.0
    %561 = vmatpush1.msra.mxu0 %v542
    %562 = vmatprep.subr.mxu0 0.0
    %563 = vmatpush1.msra.mxu0 %v543
    %564 = vmatprep.subr.mxu0 0.0
    %565 = vmatpush1.msra.mxu0 %v544
    %566 = vmatprep.subr.mxu0 0.0
    %567 = vmatpush1.msra.mxu0 %v545
    %568 = vmatprep.subr.mxu0 0.0
    %569 = vmatpush1.msra.mxu0 %v546
    %570 = vmatprep.subr.mxu0 0.0
    %571 = vmatpush1.msra.mxu0 %v547
    %572 = vmatprep.subr.mxu0 0.0
    %573 = vmatpush1.msra.mxu0 0.0
    %574 = vmatprep.subr.mxu0 0.0
    %575 = vmatpush1.msra.mxu0 0.0
    %576 = vmatprep.subr.mxu0 0.0
    %577 = vmatpush1.msra.mxu0 0.0
    %578 = vmatprep.subr.mxu0 0.0
    %579 = vmatpush1.msra.mxu0 0.0
    %580 = vmatprep.subr.mxu0 0.0
    %581 = vmatpush1.msra.mxu0 0.0
    %582 = vmatprep.subr.mxu0 0.0
    %583 = vmatpush1.msra.mxu0 0.0
    %584 = vmatprep.subr.mxu0 0.0
    %585 = vmatpush1.msra.mxu0 0.0
    %586 = vmatprep.subr.mxu0 0.0
    %587 = vmatpush1.msra.mxu0 0.0
    %588 = vmatprep.subr.mxu0 0.0
    %589 = vmatpush1.msra.mxu0 0.0
    %590 = vmatprep.subr.mxu0 0.0
    %591 = vmatpush1.msra.mxu0 0.0
    %592 = vmatprep.subr.mxu0 0.0
    %593 = vmatpush1.msra.mxu0 0.0
    %594 = vmatprep.subr.mxu0 0.0
    %595 = vmatpush1.msra.mxu0 0.0
    %596 = vmatprep.subr.mxu0 0.0
    %597 = vmatpush1.msra.mxu0 0.0
    %598 = vmatprep.subr.mxu0 0.0
    %599 = vmatpush1.msra.mxu0 0.0
    %600 = vmatprep.subr.mxu0 0.0
    %601 = vmatpush1.msra.mxu0 0.0
    %602 = vmatprep.subr.mxu0 0.0
    %603 = vmatpush1.msra.mxu0 0.0
    %604 = vmatprep.subr.mxu0 0.0
    %605 = vmatpush1.msra.mxu0 0.0
    %606 = vmatprep.subr.mxu0 0.0
    %607 = vmatpush1.msra.mxu0 0.0
    %608 = vmatprep.subr.mxu0 0.0
    %609 = vmatpush1.msra.mxu0 0.0
    %610 = vmatprep.subr.mxu0 0.0
    %611 = vmatpush1.msra.mxu0 0.0
    %612 = vmatprep.subr.mxu0 0.0
    %613 = vmatpush1.msra.mxu0 0.0
    %614 = vmatprep.subr.mxu0 0.0
    %615 = vmatpush1.msra.mxu0 0.0
    %616 = vmatprep.subr.mxu0 0.0
    %617 = vmatpush1.msra.mxu0 0.0
    %618 = vmatprep.subr.mxu0 0.0
    %619 = vmatpush1.msra.mxu0 0.0
    %620 = vmatprep.mubr.f32.mxu0 0.0
    %621 = vmatmul.mubr.f32.gmra.mrb[0].mxu0 %v554
    %v622 = vpop.f32.mrb[0].mxu0
    %v623 = vadd.f32 %v552, %v622
    %v624 = vpop.f32.mrb[0].mxu0
    %625 = vdwg.mxu0
    %v626 = vxor.u32 %v623, 2147483648
    %v627 = vmul.f32 %v626, 1.442695
    %v628 = vpow.pop %v627
    %v629 = vadd.f32 %v628, 1.0
    %v630 = vrcp.pop %v629
    %v631 = vmul.f32 1.0, %v630
    %633 = vrot.lane.b32.xlu0 %v281, 64
    %v634 = vpop.permute.xlu0 %633
    %637 = vrot.lane.b32.xlu0 %v360, 72
    %v638 = vpop.permute.xlu0 %637
    %640 = vrot.lane.b32.xlu0 %v375, 80
    %v641 = vpop.permute.xlu0 %640
    %v643 = vsel %vm39, %v631, %v634
    %vm644 = vcmask 588800
    %v645 = vsel %vm644, %v643, %v638
    %vm646 = vcmask 654336
    %v647 = vsel %vm646, %v645, %v641
    %vm648 = vcmask 719872
    %v649 = vsel %vm648, %v647, 0.0
    %650 = vst [vmem:[%s2] sm:$0xff] %v649
    // Predicated region
    $region14: #{gmm_vae_forward_packed.1} parent=1 // pred_check
      _
    $region15: #{gmm_vae_forward_packed.1} parent=1 // pred_check_branch
      %652 = sbr.rel (0) target = $region17
    $region16: #{gmm_vae_forward_packed.1} parent=1 // pred_region
      _
    $region17: #{gmm_vae_forward_packed.1} parent=1 // pred_fallthru
      _
    // Predicated region
    $region18: #{gmm_vae_forward_packed.1} parent=1 // pred_check
      _
    $region19: #{gmm_vae_forward_packed.1} parent=1 // pred_check_branch
      %654 = sbr.rel (0) target = $region21
    $region20: #{gmm_vae_forward_packed.1} parent=1 // pred_region
      _
    $region21: #{gmm_vae_forward_packed.1} parent=1 // pred_fallthru
      _
    %655 = vsyncpa [#allocation3], 1

</llo_original>
